<compile_context>
chip_gen: v6e
topology: v6e:2x2x1
jax: 0.10.0
libtpu: 0.0.40
codegen_flags: <defaults>
</compile_context>

<pallas_src>
import functools

import jax
import jax.numpy as jnp
from jax.experimental import pallas as pl
from jax.experimental.pallas import tpu as pltpu


def _detect_num_cores():
    """v7x has 2 TensorCores per chip; everything else we target has 1."""
    try:
        kind = jax.devices()[0].device_kind.lower()
    except Exception:
        return 1
    return 2 if "v7" in kind else 1


def _row_ce(logits_f32, target_i32):
    """Stable per-row cross-entropy; also returns the row/class match mask."""
    t, c1 = logits_f32.shape
    m = jnp.max(logits_f32, axis=-1, keepdims=True)                      # [T,1]
    lse = m + jnp.log(jnp.sum(jnp.exp(logits_f32 - m), axis=-1,
                              keepdims=True))                            # [T,1]
    class_ids = jax.lax.broadcasted_iota(jnp.int32, (t, c1), 1)          # [T,C+1]
    match = class_ids == target_i32                                      # [T,C+1]
    # Fused one-hot gather: no f32 one-hot materialization, no extra mul.
    picked = jnp.sum(jnp.where(match, logits_f32, 0.0), axis=-1,
                     keepdims=True)                                      # [T,1]
    return lse - picked, match


def _focal_modulation(ce, gamma):
    """(1 - exp(-ce)) ** gamma, specialized on the static gamma."""
    p = jnp.exp(-ce)
    one_m_p = jnp.maximum(1.0 - p, 0.0)        # ce can round to -1 ulp
    if gamma == 0.0:
        return jnp.ones_like(one_m_p)
    if gamma == 1.0:
        return one_m_p
    if gamma == 2.0:
        return one_m_p * one_m_p
    # Fractional gamma: exact 0 at p == 1 (avoids the old (1e-12)**gamma bias).
    return jnp.where(one_m_p > 0.0,
                     jnp.exp(gamma * jnp.log(jnp.maximum(one_m_p, 1e-30))),
                     0.0)


def _accumulate(out_ref, loss, *, n_total, tile_n, tiles_per_core, num_tiles):
    """Accumulate sum(loss); mask padded rows only on the final tile."""
    if n_total % tile_n == 0:                      # static: no partial tile
        out_ref[...] += jnp.sum(loss)
        return

    g = pl.program_id(0) * tiles_per_core + pl.program_id(1)   # global tile

    @pl.when(g == num_tiles - 1)
    def _():
        # Mask stays AFTER all row-wise math: where() discards any NaN/Inf
        # produced by the undefined padded rows.
        row = jax.lax.broadcasted_iota(jnp.int32, loss.shape, 0) + g * tile_n
        out_ref[...] += jnp.sum(jnp.where(row < n_total, loss, 0.0))

    @pl.when(g < num_tiles - 1)
    def _():
        out_ref[...] += jnp.sum(loss)


def _focal_loss_supervised_kernel(logits_ref, target_ref, out_ref, *,
                                  gamma, n_total, tile_n, tiles_per_core,
                                  num_tiles):
    @pl.when(pl.program_id(1) == 0)
    def _():
        out_ref[...] = jnp.zeros_like(out_ref)

    logits = logits_ref[...].astype(jnp.float32)        # [TN, C+1]
    ce, _ = _row_ce(logits, target_ref[...])
    loss = _focal_modulation(ce, gamma) * ce            # [TN, 1]
    _accumulate(out_ref, loss, n_total=n_total, tile_n=tile_n,
                tiles_per_core=tiles_per_core, num_tiles=num_tiles)


def _focal_loss_sub_kernel(logits_ref, target_ref, weak_ref, out_ref, bw_ref, *,
                           gamma, num_classes, n_total, tile_n, tiles_per_core,
                           num_tiles):
    @pl.when(pl.program_id(1) == 0)
    def _():
        out_ref[...] = jnp.zeros_like(out_ref)
        # Hoisted class-balance weights: computed once (per core) into a
        # resident (1, C+1) scratch row; background lane stays 0.
        w = 1.0 - weak_ref[...].astype(jnp.float32)                  # [M, C]
        wmean = jnp.mean(w, axis=0, keepdims=True)                   # [1, C]
        wadj = (wmean - jnp.mean(wmean)) * 0.05                      # [1, C]
        bw_ref[...] = jnp.zeros_like(bw_ref)
        bw_ref[:, :num_classes] = wadj

    logits = logits_ref[...].astype(jnp.float32)        # [TN, C+1]
    ce, match = _row_ce(logits, target_ref[...])
    loss = _focal_modulation(ce, gamma) * ce            # [TN, 1]
    # balance_weight = 1 + wadj[target] (0 for background), gathered through
    # the existing match mask -- no one-hot build, no lane-slice copy.
    bw = 1.0 + jnp.sum(jnp.where(match, bw_ref[...], 0.0), axis=-1,
                       keepdims=True)                   # [TN, 1]
    loss = loss * bw
    _accumulate(out_ref, loss, n_total=n_total, tile_n=tile_n,
                tiles_per_core=tiles_per_core, num_tiles=num_tiles)


def focal_loss(logits, target, branch, weak_branch_output, *,
               gamma=1.0, num_classes=80, tile_n=None, num_cores=None):
    """Pallas implementation of FocalLoss.forward; returns a scalar f32."""
    n, c1 = logits.shape
    assert c1 == num_classes + 1
    target2d = target.reshape(n, 1).astype(jnp.int32)

    # ---- tile size: budget against the LANE-PADDED VMEM footprint ----
    #   logits block  : 2 (double-buffer) * padded_c1 * itemsize   per row
    #   target block  : (tn,1) i32 pads to 128 lanes -> 512 B x 2  per row
    #   f32 temporaries: ~6 live [tn, padded_c1] arrays             per row
    padded_c1 = ((c1 + 127) // 128) * 128
    in_itemsize = jnp.dtype(logits.dtype).itemsize
    per_row = 2 * padded_c1 * in_itemsize + 2 * 128 * 4 + 6 * padded_c1 * 4
    budget = 24 * 1024 * 1024            # stays under the 32 MiB scoped cap
    cap = max(512, min(4096, (budget // per_row) // 128 * 128))
    if tile_n is None:
        tn = n if n <= cap else cap      # prefer one tile = whole N if it fits
    else:
        tn = min(int(tile_n), n)
    if tn < n:
        tn = max(8, (tn // 8) * 8)       # blocked second-minor dim: multiple of 8
    num_tiles = pl.cdiv(n, tn)

    # ---- v7x: split the tile grid across the 2 TensorCores ----
    cores = num_cores if num_cores is not None else _detect_num_cores()
    cs = cores if (cores > 1 and num_tiles >= cores
                   and num_tiles % cores == 0) else 1
    tpc = num_tiles // cs
    grid = (cs, tpc)

    logits_spec = pl.BlockSpec((tn, c1), lambda c, i: (c * tpc + i, 0))
    target_spec = pl.BlockSpec((tn, 1), lambda c, i: (c * tpc + i, 0))
    # Per-core (8,128) partial-sum slab: lane/sublane aligned, one block/core.
    out_spec = pl.BlockSpec((8, 128), lambda c, i: (c, 0))

    flops = 10 * n * c1
    transcendentals = n * c1 + 2 * n
    bytes_accessed = n * c1 * in_itemsize + 4 * n + cs * 8 * 128 * 4

    if branch == "sub_supervised":
        m_weak = weak_branch_output.shape[0]
        kernel = functools.partial(
            _focal_loss_sub_kernel, gamma=float(gamma),
            num_classes=num_classes, n_total=n, tile_n=tn,
            tiles_per_core=tpc, num_tiles=num_tiles)
        in_specs = [logits_spec, target_spec,
                    pl.BlockSpec(memory_space=pltpu.MemorySpace.VMEM)]
        scratch = [pltpu.VMEM((1, c1), jnp.float32)]      # padded wadj row
        args = (logits, target2d, weak_branch_output)     # native dtypes
        flops += 4 * m_weak * num_classes
        bytes_accessed += (m_weak * num_classes
                           * jnp.dtype(weak_branch_output.dtype).itemsize)
    else:
        kernel = functools.partial(
            _focal_loss_supervised_kernel, gamma=float(gamma),
            n_total=n, tile_n=tn, tiles_per_core=tpc, num_tiles=num_tiles)
        in_specs = [logits_spec, target_spec]             # no weak DMA
        scratch = []
        args = (logits, target2d)

    out = pl.pallas_call(
        kernel,
        out_shape=jax.ShapeDtypeStruct((cs * 8, 128), jnp.float32),
        grid=grid,
        in_specs=in_specs,
        out_specs=out_spec,
        scratch_shapes=scratch,
        compiler_params=pltpu.CompilerParams(
            dimension_semantics=("parallel", "arbitrary"),
            vmem_limit_bytes=32 * 1024 * 1024),
        cost_estimate=pl.CostEstimate(
            flops=int(flops), transcendentals=int(transcendentals),
            bytes_accessed=int(bytes_accessed)),
    )(*args)
    # Each core stores its partial sum broadcast over its (8,128) slab.
    return jnp.sum(out[0::8, 0])


def _reference(logits, target, branch, weak, gamma, num_classes):
    """Pure-JAX reference mirroring the PyTorch module."""
    logp = jax.nn.log_softmax(logits.astype(jnp.float32), axis=-1)
    ce = -jnp.take_along_axis(logp, target[:, None].astype(jnp.int32),
                              axis=-1)[:, 0]
    p = jnp.exp(-ce)
    loss = (1.0 - p) ** gamma * ce
    if branch == "sub_supervised":
        w = 1.0 - weak.astype(jnp.float32)
        w = w.mean(0)
        w = (w - w.mean()) * 0.05
        bwt = jnp.ones(num_classes + 1, jnp.float32).at[:num_classes].add(w)
        loss = loss * bwt[target]
    return loss.sum()


if __name__ == "__main__":
    num_classes = 16   # small synthetic setting (module default is 80)
    key = jax.random.PRNGKey(0)
    k1, k2, k3 = jax.random.split(key, 3)

    # (N, M, tile_n, dtype) covering: single auto tile; multi-tile with a
    # partial last tile (grid + last-tile mask path); odd tile count; bf16
    # inputs with an even tile count (exercises the 2-TC split on v7x).
    configs = [
        (8, 4, None, jnp.float32),
        (20, 4, 8, jnp.float32),
        (300, 5, 128, jnp.float32),
        (512, 4, 128, jnp.bfloat16),
    ]

    for (n, m, tile_n, dt) in configs:
        logits = jax.random.normal(k1, (n, num_classes + 1),
                                   dtype=jnp.float32).astype(dt)
        target = jax.random.randint(k2, (n,), 0, num_classes + 1,
                                    dtype=jnp.int32)
        weak = jax.nn.sigmoid(
            jax.random.normal(k3, (m, num_classes),
                              dtype=jnp.float32)).astype(dt)
        for branch in ("supervised", "sub_supervised"):
            for gamma in (1.0, 2.0, 0.5):
                out = focal_loss(logits, target, branch, weak,
                                 gamma=gamma, num_classes=num_classes,
                                 tile_n=tile_n)
                out = jax.block_until_ready(out)
                ref = _reference(logits, target, branch, weak, gamma,
                                 num_classes)
                assert jnp.allclose(out, ref, rtol=5e-5, atol=1e-3), (
                    n, branch, gamma, dt, float(out), float(ref))

    print("KERNEL_OK")
</pallas_src>

<mosaic_0001>
module attributes {stable_mosaic.version = 11 : i64} {
  func.func @_focal_loss_supervised_kernel(%arg0: i32, %arg1: i32, %arg2: memref<8x17xf32, #tpu.memory_space<vmem>>, %arg3: memref<8x1xi32, #tpu.memory_space<vmem>>, %arg4: memref<8x128xf32, #tpu.memory_space<vmem>>) attributes {dimension_semantics = [#tpu.dimension_semantics<parallel>, #tpu.dimension_semantics<arbitrary>], iteration_bounds = array<i64: 1, 1>, scalar_prefetch = 0 : i64, scratch_operands = 0 : i64, tpu.core_type = #tpu.core_type<tc>, window_params = [{transform_indices = @transform_0, window_bounds = array<i64: 8, 17>}, {transform_indices = @transform_1, window_bounds = array<i64: 8, 1>}, {transform_indices = @transform_2, window_bounds = array<i64: 8, 128>}]} {
    %c0_i32 = arith.constant 0 : i32
    %0 = arith.cmpi eq, %arg1, %c0_i32 : i32
    %1 = arith.extui %0 : i1 to i32
    %c0_i32_0 = arith.constant 0 : i32
    %2 = arith.cmpi ne, %1, %c0_i32_0 : i32
    scf.if %2 {
      %cst_15 = arith.constant 0.000000e+00 : f32
      %38 = vector.broadcast %cst_15 : f32 to vector<8x128xf32>
      %c0_16 = arith.constant 0 : index
      %c0_17 = arith.constant 0 : index
      %39 = vector.load %arg4[%c0_16, %c0_17] : memref<8x128xf32, #tpu.memory_space<vmem>>, vector<8x128xf32>
      tpu.vector_store %arg4[%c0_16, %c0_17], %38 {strides = array<i32>} : memref<8x128xf32, #tpu.memory_space<vmem>>, vector<8x128xf32>,
    } else {
    }
    %c0 = arith.constant 0 : index
    %c0_1 = arith.constant 0 : index
    %3 = vector.load %arg2[%c0, %c0_1] : memref<8x17xf32, #tpu.memory_space<vmem>>, vector<8x17xf32>
    %c0_2 = arith.constant 0 : index
    %c0_3 = arith.constant 0 : index
    %4 = vector.load %arg3[%c0_2, %c0_3] : memref<8x1xi32, #tpu.memory_space<vmem>>, vector<8x1xi32>
    %cst = arith.constant dense<0xFF800000> : vector<8xf32>
    %5 = vector.multi_reduction <maximumf>, %3, %cst [1] : vector<8x17xf32> to vector<8xf32>
    %6 = vector.shape_cast %5 : vector<8xf32> to vector<8x1xf32>
    %7 = vector.broadcast %6 : vector<8x1xf32> to vector<8x17xf32>
    %8 = arith.subf %3, %7 : vector<8x17xf32>
    %9 = math.exp %8 : vector<8x17xf32>
    %cst_4 = arith.constant dense<0.000000e+00> : vector<8xf32>
    %10 = vector.multi_reduction <add>, %9, %cst_4 [1] : vector<8x17xf32> to vector<8xf32>
    %11 = vector.shape_cast %10 : vector<8xf32> to vector<8x1xf32>
    %12 = math.log %11 : vector<8x1xf32>
    %13 = arith.addf %6, %12 : vector<8x1xf32>
    %14 = tpu.iota {dimensions = array<i32: 1>} : vector<8x17xi32>
    %15 = vector.broadcast %4 : vector<8x1xi32> to vector<8x17xi32>
    %16 = arith.cmpi eq, %14, %15 : vector<8x17xi32>
    %cst_5 = arith.constant 0.000000e+00 : f32
    %17 = vector.broadcast %cst_5 : f32 to vector<8x17xf32>
    %18 = arith.select %16, %3, %17 : vector<8x17xi1>, vector<8x17xf32>
    %cst_6 = arith.constant dense<0.000000e+00> : vector<8xf32>
    %19 = vector.multi_reduction <add>, %18, %cst_6 [1] : vector<8x17xf32> to vector<8xf32>
    %20 = vector.shape_cast %19 : vector<8xf32> to vector<8x1xf32>
    %21 = arith.subf %13, %20 : vector<8x1xf32>
    %cst_7 = arith.constant 0.000000e+00 : f32
    %22 = vector.broadcast %cst_7 : f32 to vector<8x1xf32>
    %23 = arith.subf %22, %21 : vector<8x1xf32>
    %24 = math.exp %23 : vector<8x1xf32>
    %cst_8 = arith.constant 1.000000e+00 : f32
    %25 = vector.broadcast %cst_8 : f32 to vector<8x1xf32>
    %26 = arith.subf %25, %24 : vector<8x1xf32>
    %cst_9 = arith.constant 0.000000e+00 : f32
    %27 = vector.broadcast %cst_9 : f32 to vector<8x1xf32>
    %28 = arith.maximumf %26, %27 : vector<8x1xf32>
    %29 = arith.mulf %28, %21 : vector<8x1xf32>
    %c0_10 = arith.constant 0 : index
    %c0_11 = arith.constant 0 : index
    %30 = vector.load %arg4[%c0_10, %c0_11] : memref<8x128xf32, #tpu.memory_space<vmem>>, vector<8x128xf32>
    %31 = vector.shape_cast %29 : vector<8x1xf32> to vector<1x8x1xf32>
    %cst_12 = arith.constant dense<0.000000e+00> : vector<1xf32>
    %32 = vector.multi_reduction <add>, %31, %cst_12 [1, 2] : vector<1x8x1xf32> to vector<1xf32>
    %33 = vector.shape_cast %32 : vector<1xf32> to vector<1x1x1xf32>
    %34 = vector.extract %33[0, 0, 0] : f32 from vector<1x1x1xf32>
    %35 = vector.broadcast %34 : f32 to vector<8x128xf32>
    %36 = arith.addf %30, %35 : vector<8x128xf32>
    %c0_13 = arith.constant 0 : index
    %c0_14 = arith.constant 0 : index
    %37 = vector.load %arg4[%c0_13, %c0_14] : memref<8x128xf32, #tpu.memory_space<vmem>>, vector<8x128xf32>
    tpu.vector_store %arg4[%c0_13, %c0_14], %36 {strides = array<i32>} : memref<8x128xf32, #tpu.memory_space<vmem>>, vector<8x128xf32>,
    return
  }
  func.func @transform_0(%arg0: i32, %arg1: i32) -> (i32, i32) {
    %c1_i32 = arith.constant 1 : i32
    %0 = arith.muli %arg0, %c1_i32 : i32
    %1 = arith.addi %0, %arg1 : i32
    %c0_i32 = arith.constant 0 : i32
    %c0_i32_0 = arith.constant 0 : i32
    return %1, %c0_i32 : i32, i32
  }
  func.func @transform_1(%arg0: i32, %arg1: i32) -> (i32, i32) {
    %c1_i32 = arith.constant 1 : i32
    %0 = arith.muli %arg0, %c1_i32 : i32
    %1 = arith.addi %0, %arg1 : i32
    %c0_i32 = arith.constant 0 : i32
    %c0_i32_0 = arith.constant 0 : i32
    return %1, %c0_i32 : i32, i32
  }
  func.func @transform_2(%arg0: i32, %arg1: i32) -> (i32, i32) {
    %c0_i32 = arith.constant 0 : i32
    %c0_i32_0 = arith.constant 0 : i32
    return %arg0, %c0_i32 : i32, i32
  }
}

</mosaic_0001>

<llo_original>
// kernel: tpu_custom_call.1
$region0: #{tpu_custom_call.1}
  #allocation0 [shape = 'u32[]', space=smem, size = 0x4, offset = 0x4, fixed_abs, tag = 'smem constant byte address 0x4 - core index']
  #allocation1 [shape = 'u32[144,128]{1,0:T(1,128)}', space=vmem, size = 0x12000, scoped, tag = 'internal scratch']
  %s0 = inlined_call_operand.vmem [shape: f32[8,17], index: 0, kind: input, shape index: {}]
  %s1 = inlined_call_operand.vmem [shape: s32[8,1], index: 1, kind: input, shape index: {}]
  %s2 = inlined_call_operand.hbm [shape: f32[8,128], index: 2, kind: output, shape index: {}]
  %s3 = sld [smem:[#allocation0]]
  $region22: #{tpu_custom_call.1} parent=0
    _
  %s5 = ssub.s32 1, %s3
  %s6 = scalar_select 0, %s5, %s3
  $region1: #{tpu_custom_call.1} parent=0
    #allocation2 [shape = 'u8[4096]{0}', space=vmem, size = 0x1000, scoped, tag = 'output window, operand 0, single buffered']
    #allocation3 [shape = 's32[1]{0}', space=sflag, size = 0x4, scoped, tag = 'scoped memory for tpu_custom_call.1']
    %7 = vsyncpa [#allocation3], 0
    // Predicated region
    $region2: #{tpu_custom_call.1} parent=1 // pred_check
      _
    $region3: #{tpu_custom_call.1} parent=1 // pred_check_branch
      %9 = sbr.rel (0) target = $region5
    $region4: #{tpu_custom_call.1} parent=1 // pred_region
      %s10 = sadd.s32 0, 0
      %p11 = scmp.lt.s32.totalorder %s10, 0
      %s12 = scalar_select %p11, %s10, 0
      %s13 = smul.addr %s12, 8
      %s14 = scalar_lea.vmem %s0, %s13
      %s15 = sadd.s32 0, 0
    $region5: #{tpu_custom_call.1} parent=1 // pred_fallthru
      _
    // Predicated region
    $region6: #{tpu_custom_call.1} parent=1 // pred_check
      _
    $region7: #{tpu_custom_call.1} parent=1 // pred_check_branch
      %17 = sbr.rel (0) target = $region9
    $region8: #{tpu_custom_call.1} parent=1 // pred_region
      %s18 = sadd.s32 0, 0
      %p19 = scmp.lt.s32.totalorder %s18, 0
      %s20 = scalar_select %p19, %s18, 0
      %s21 = smul.addr %s20, 8
      %s22 = scalar_lea.vmem %s1, %s21
      %s23 = sadd.s32 0, 0
    $region9: #{tpu_custom_call.1} parent=1 // pred_fallthru
      _
    %s24 = sadd.s32 0, 0
    %p25 = scmp.lt.s32.totalorder %s24, 0
    %s26 = scalar_select %p25, %s24, 0
    %s27 = smul.addr %s26, 8
    %s28 = scalar_lea.vmem %s0, %s27
    %s29 = sadd.s32 0, 0
    %p30 = scmp.lt.s32.totalorder %s29, 0
    %s31 = scalar_select %p30, %s29, 0
    %s32 = smul.addr %s31, 8
    %s33 = scalar_lea.vmem %s1, %s32
    %s34 = sadd.s32 0, 0
    %p35 = scmp.lt.s32.totalorder %s34, 0
    %s36 = scalar_select %p35, %s34, 0
    %s37 = smul.addr %s36, 8
    %s38 = scalar_lea.vmem %s0, %s37
    %s39 = sadd.s32 0, 0
    %s40 = sadd.s32 0, 0
    %p41 = scmp.lt.s32.totalorder %s40, 0
    %s42 = scalar_select %p41, %s40, 0
    %s43 = smul.addr %s42, 8
    %s44 = scalar_lea.vmem %s1, %s43
    %s45 = sadd.s32 0, 0
    %p46 = scmp.eq.s32.totalorder 0, 0
    // Predicated region
    $region10: #{tpu_custom_call.1} parent=1 // pred_check
      %p47 = pneg %p46
    $region11: #{tpu_custom_call.1} parent=1 // pred_check_branch
      %49 = sbr.rel (%p47) target = $region13
    $region12: #{tpu_custom_call.1} parent=1 // pred_region
      %50 = vst [vmem:[#allocation2] sm:$0xff] 0.0
    $region13: #{tpu_custom_call.1} parent=1 // pred_fallthru
      _
    %v51 = vld [vmem:[%s38] sm:$0xff]
    %v52 = vld [vmem:[%s44] sm:$0xff]
    %vm53 = vcmask 138240
    %v54 = vsel %vm53, %v51, -inf
    %55 = vmax.xlane.f32.xlu0 %v54
    %v56 = vpop.xlane.xlu0 %55
    %v57 = vsub.f32 %v51, %v56
    %v58 = vmul.f32 %v57, 1.442695
    %v59 = vpow.pop %v58
    %v60 = vsel %vm53, %v59, 0.0
    %61 = vadd.xlane.f32.xlu0 %v60
    %v62 = vpop.xlane.xlu0 %61
    %v63 = vlog2.pop %v62
    %v64 = vmul.f32 %v63, 0.6931472
    %v65 = vadd.f32 %v56, %v64
    %v66 = vlaneseq
    %v67 = vand.u32 %v66, 127
    %68 = vset.pattern.permute.xlu0 0
    %69 = vperm.xlu0 %68, %v52
    %v70 = vpop.permute.xlu0 %69
    %vm71 = vcmp.eq.s32.totalorder %v67, %v70
    %v72 = vsel %vm71, %v51, 0.0
    %v73 = vsel %vm53, %v72, 0.0
    %74 = vadd.xlane.f32.xlu0 %v73
    %v75 = vpop.xlane.xlu0 %74
    %v76 = vsub.f32 %v65, %v75
    %v77 = vsub.f32 0.0, %v76
    %v78 = vmul.f32 %v77, 1.442695
    %v79 = vpow.pop %v78
    %v80 = vsub.f32 1.0, %v79
    %v81 = vmax.f32 %v80, 0.0
    %v82 = vmul.f32 %v81, %v76
    %v83 = vld [vmem:[#allocation2] sm:$0xff]
    %vm84 = vcmask 7168
    %v85 = vsel %vm84, %v82, 0.0
    %86 = vadd.xlane.f32.xlu0 %v85
    %v87 = vpop.xlane.xlu0 %86
    %v88 = vrot.slane %v87, 4
    %v89 = vadd.f32 %v87, %v88
    %v90 = vrot.slane %v89, 2
    %v91 = vadd.f32 %v89, %v90
    %v92 = vrot.slane %v91, 1
    %v93 = vadd.f32 %v91, %v92
    %s94 = vtos %v93
    %v95 = vstv %s94
    %v96 = vadd.f32 %v83, %v95
    %97 = vst [vmem:[#allocation2] sm:$0xff] %v96
    // Predicated region
    $region14: #{tpu_custom_call.1} parent=1 // pred_check
      _
    $region15: #{tpu_custom_call.1} parent=1 // pred_check_branch
      %99 = sbr.rel (0) target = $region17
    $region16: #{tpu_custom_call.1} parent=1 // pred_region
      %s101 = ssub.s32 128, 128
      %102 = vsyncadd [#allocation3], %s101
      %s104 = sshll.u32 [#allocation2], 4
      %s105 = int_to_ptr.vmem [resolvable:$true] %s104
      %107 = dma.vmem_to_hbm [thread:$0]  %s105, 128, %s2, [#allocation3]
    $region17: #{tpu_custom_call.1} parent=1 // pred_fallthru
      _
    // Predicated region
    $region18: #{tpu_custom_call.1} parent=1 // pred_check
      _
    $region19: #{tpu_custom_call.1} parent=1 // pred_check_branch
      %109 = sbr.rel (0) target = $region21
    $region20: #{tpu_custom_call.1} parent=1 // pred_region
      %110 = dma.done [#allocation3], 128
    $region21: #{tpu_custom_call.1} parent=1 // pred_fallthru
      _
    %111 = vsyncpa [#allocation3], 1

</llo_original>
